<compile_context>
chip_gen: v7x
topology: tpu7x:2x2x1
jax: 0.10.0
libtpu: 0.0.40
codegen_flags: <defaults>
</compile_context>

<pallas_src>
import functools
import math

import jax
import jax.numpy as jnp
import numpy as np
from jax.experimental import pallas as pl
from jax.experimental.pallas import tpu as pltpu


def _base_anchors(anchor_shapes: np.ndarray) -> np.ndarray:
    """Equivalent of generate_anchors_yolo: (A, 4) = [-w/2, -h/2, w/2, h/2]."""
    A = anchor_shapes.shape[0]
    anchors = np.zeros((A, 4), dtype=np.float64)
    anchors[:, 2:] = anchor_shapes
    anchors[:, 0::2] -= np.tile(anchors[:, 2] * 0.5, (2, 1)).T
    anchors[:, 1::2] -= np.tile(anchors[:, 3] * 0.5, (2, 1)).T
    return anchors


def _round_up(x: int, m: int) -> int:
    return ((x + m - 1) // m) * m


def _anchor_kernel(shift_ref, base_ref, mask_ref, out_ref):
    # shift_ref: (2, TK)   row 0 = x shift per grid cell, row 1 = y shift
    # base_ref:  (A*4, 1)  flattened base anchors, one row per (anchor, coord)
    # mask_ref:  (A*4, 1)  1.0 where coord is x (even), 0.0 where y (odd)
    # out_ref:   (A*4, TK) row r = a*4 + coord, lane = grid cell k
    sx = shift_ref[0:1, :]          # (1, TK)
    sy = shift_ref[1:2, :]          # (1, TK)
    base = base_ref[...]            # (A*4, 1)
    m = mask_ref[...]               # (A*4, 1)
    out_ref[...] = base + m * sx + (1.0 - m) * sy


def _lane_tiling(K: int) -> tuple[int, int]:
    """Pick (K_pad, tile) for the lane axis."""
    LANE_TILE = 65536
    K_pad = _round_up(K, 128)
    tile = LANE_TILE if K_pad > LANE_TILE else K_pad
    # v7x has two TensorCores: give the "parallel" lane axis >= 2 blocks when
    # there is enough work.  Single-TC chips (v5e/v6e) keep a single big block.
    try:
        kind = jax.devices()[0].device_kind.lower()
    except Exception:  # pragma: no cover - device query is best-effort
        kind = ""
    if "v7" in kind and K_pad >= 256 and (K_pad // tile) < 2:
        tile = _round_up(pl.cdiv(K_pad, 2), 128)
    K_pad = _round_up(K_pad, tile)
    return K_pad, tile


def _shifted_anchors(fh: int, fw: int, stride: int, base: np.ndarray) -> jnp.ndarray:
    """Returns (1, K*A, 4) shifted anchors in the PyTorch row order."""
    A = base.shape[0]
    K = fh * fw
    A4 = 4 * A
    K_pad, tile = _lane_tiling(K)
    n_blocks = K_pad // tile

    # Static per-cell shift tables (cell k = y*fw + x), built at trace time:
    # no integer div/mod in the kernel.
    xs = (np.arange(fw, dtype=np.float64) + 0.5) * stride
    ys = (np.arange(fh, dtype=np.float64) + 0.5) * stride
    shifts_np = np.zeros((2, K_pad), dtype=np.float32)
    shifts_np[0, :K] = np.tile(xs, fh)        # per-cell x shift
    shifts_np[1, :K] = np.repeat(ys, fw)      # per-cell y shift

    base_col = base.reshape(-1, 1).astype(np.float32)                     # (A*4, 1)
    mask_col = np.array(
        [[1.0] if (r % 2) == 0 else [0.0] for r in range(A4)], np.float32  # (A*4, 1)
    )

    pallas_fn = pl.pallas_call(
        _anchor_kernel,
        out_shape=jax.ShapeDtypeStruct((A4, K_pad), jnp.float32),
        grid=(n_blocks,),
        in_specs=[
            pl.BlockSpec((2, tile), lambda i: (0, i)),
            pl.BlockSpec((A4, 1), lambda i: (0, 0)),
            pl.BlockSpec((A4, 1), lambda i: (0, 0)),
        ],
        out_specs=pl.BlockSpec((A4, tile), lambda i: (0, i)),
        compiler_params=pltpu.CompilerParams(
            dimension_semantics=("parallel",)
        ),
    )

    @jax.jit
    def run(shifts, base_c, mask_c):
        out = pallas_fn(shifts, base_c, mask_c)                 # (A*4, K_pad)
        # Relayout (fused by XLA inside this jit) back to PyTorch convention:
        # (A*4, K) -> (K*A, 4), then add the leading batch dim.
        out = out[:, :K].reshape(A, 4, K)
        out = jnp.transpose(out, (2, 0, 1)).reshape(K * A, 4)
        return out[None, ...]                                   # (1, K*A, 4)

    return run(jnp.asarray(shifts_np), jnp.asarray(base_col), jnp.asarray(mask_col))


class YoloAnchorsPallas:
    def __init__(self, num_anchors: int):
        self.strides = [8]
        self.num_anchors = num_anchors
        anchors = np.array(
            [[18, 18], [23, 23], [29, 29], [35, 35], [44, 45]], dtype=np.float64
        ).reshape((1, num_anchors, 2))
        self.anchor_shapes = anchors
        self._cache = {}  # anchors depend only on the spatial shape

    def __call__(self, image: jnp.ndarray) -> jnp.ndarray:
        # image: NCHW; only the spatial shape is used (matches the PyTorch module).
        H, W = int(image.shape[2]), int(image.shape[3])
        key = (H, W)
        if key in self._cache:
            return self._cache[key]
        pieces = []
        for idx, stride in enumerate(self.strides):
            fh = int(math.ceil(H / stride))
            fw = int(math.ceil(W / stride))
            base = _base_anchors(self.anchor_shapes[idx])            # (A, 4)
            pieces.append(_shifted_anchors(fh, fw, stride, base))    # (1, K*A, 4)
        result = jnp.concatenate(pieces, axis=1)                     # (1, sum K*A, 4)
        self._cache[key] = result
        return result


def _numpy_reference(image_shape, num_anchors):
    """Direct port of the PyTorch module's numpy math for verification."""
    strides = [8]
    anchor_shapes = np.array(
        [[18, 18], [23, 23], [29, 29], [35, 35], [44, 45]]
    ).reshape((1, num_anchors, 2))
    H, W = image_shape
    all_anchors = np.zeros((0, 4), dtype=np.float32)
    for idx, stride in enumerate(strides):
        fh, fw = int(np.ceil(H / stride)), int(np.ceil(W / stride))
        anchors = _base_anchors(anchor_shapes[idx]).astype(np.float64)
        shift_x = (np.arange(0, fw) + 0.5) * stride
        shift_y = (np.arange(0, fh) + 0.5) * stride
        shift_x, shift_y = np.meshgrid(shift_x, shift_y)
        shifts = np.vstack(
            (shift_x.ravel(), shift_y.ravel(), shift_x.ravel(), shift_y.ravel())
        ).transpose()
        A, K = anchors.shape[0], shifts.shape[0]
        out = anchors.reshape((1, A, 4)) + shifts.reshape((1, K, 4)).transpose((1, 0, 2))
        all_anchors = np.append(all_anchors, out.reshape((K * A, 4)), axis=0)
    return np.expand_dims(all_anchors, axis=0).astype(np.float32)


if __name__ == "__main__":
    key = jax.random.PRNGKey(0)
    x = jax.random.normal(key, (2, 4, 16, 16), dtype=jnp.float32)  # NCHW

    module = YoloAnchorsPallas(num_anchors=5)
    out = module(x)
    out = jax.block_until_ready(out)

    ref = _numpy_reference((16, 16), num_anchors=5)
    assert out.shape == ref.shape, (out.shape, ref.shape)
    np.testing.assert_allclose(np.asarray(out), ref, rtol=1e-6, atol=1e-6)

    # second call hits the per-shape cache (anchors are data-independent)
    out2 = jax.block_until_ready(module(x))
    np.testing.assert_allclose(np.asarray(out2), ref, rtol=1e-6, atol=1e-6)

    print("KERNEL_OK")
</pallas_src>

<mosaic_0001>
module attributes {stable_mosaic.version = 11 : i64} {
  func.func @_anchor_kernel(%arg0: i32, %arg1: memref<2x128xf32, #tpu.memory_space<vmem>>, %arg2: memref<20x1xf32, #tpu.memory_space<vmem>>, %arg3: memref<20x1xf32, #tpu.memory_space<vmem>>, %arg4: memref<20x128xf32, #tpu.memory_space<vmem>>) attributes {dimension_semantics = [#tpu.dimension_semantics<parallel>], iteration_bounds = array<i64: 1>, scalar_prefetch = 0 : i64, scratch_operands = 0 : i64, tpu.core_type = #tpu.core_type<tc>, window_params = [{transform_indices = @transform_0, window_bounds = array<i64: 2, 128>}, {pipeline_mode = #tpu.pipeline_mode<synchronous>, transform_indices = @transform_1, window_bounds = array<i64: 20, 1>}, {pipeline_mode = #tpu.pipeline_mode<synchronous>, transform_indices = @transform_2, window_bounds = array<i64: 20, 1>}, {transform_indices = @transform_3, window_bounds = array<i64: 20, 128>}]} {
    %c0 = arith.constant 0 : index
    %c0_0 = arith.constant 0 : index
    %0 = vector.load %arg1[%c0, %c0_0] : memref<2x128xf32, #tpu.memory_space<vmem>>, vector<1x128xf32>
    %c1 = arith.constant 1 : index
    %c0_1 = arith.constant 0 : index
    %1 = vector.load %arg1[%c1, %c0_1] : memref<2x128xf32, #tpu.memory_space<vmem>>, vector<1x128xf32>
    %c0_2 = arith.constant 0 : index
    %c0_3 = arith.constant 0 : index
    %2 = vector.load %arg2[%c0_2, %c0_3] : memref<20x1xf32, #tpu.memory_space<vmem>>, vector<20x1xf32>
    %c0_4 = arith.constant 0 : index
    %c0_5 = arith.constant 0 : index
    %3 = vector.load %arg3[%c0_4, %c0_5] : memref<20x1xf32, #tpu.memory_space<vmem>>, vector<20x1xf32>
    %4 = vector.broadcast %3 : vector<20x1xf32> to vector<20x128xf32>
    %5 = vector.broadcast %0 : vector<1x128xf32> to vector<20x128xf32>
    %6 = arith.mulf %4, %5 : vector<20x128xf32>
    %7 = vector.broadcast %2 : vector<20x1xf32> to vector<20x128xf32>
    %8 = arith.addf %7, %6 : vector<20x128xf32>
    %cst = arith.constant 1.000000e+00 : f32
    %9 = vector.broadcast %cst : f32 to vector<20x1xf32>
    %10 = arith.subf %9, %3 : vector<20x1xf32>
    %11 = vector.broadcast %10 : vector<20x1xf32> to vector<20x128xf32>
    %12 = vector.broadcast %1 : vector<1x128xf32> to vector<20x128xf32>
    %13 = arith.mulf %11, %12 : vector<20x128xf32>
    %14 = arith.addf %8, %13 : vector<20x128xf32>
    %c0_6 = arith.constant 0 : index
    %c0_7 = arith.constant 0 : index
    %15 = vector.load %arg4[%c0_6, %c0_7] : memref<20x128xf32, #tpu.memory_space<vmem>>, vector<20x128xf32>
    tpu.vector_store %arg4[%c0_6, %c0_7], %14 {strides = array<i32>} : memref<20x128xf32, #tpu.memory_space<vmem>>, vector<20x128xf32>,
    return
  }
  func.func @transform_0(%arg0: i32) -> (i32, i32) {
    %c0_i32 = arith.constant 0 : i32
    %c0_i32_0 = arith.constant 0 : i32
    return %c0_i32, %arg0 : i32, i32
  }
  func.func @transform_1(%arg0: i32) -> (i32, i32) {
    %c0_i32 = arith.constant 0 : i32
    %c0_i32_0 = arith.constant 0 : i32
    %c0_i32_1 = arith.constant 0 : i32
    return %c0_i32, %c0_i32_0 : i32, i32
  }
  func.func @transform_2(%arg0: i32) -> (i32, i32) {
    %c0_i32 = arith.constant 0 : i32
    %c0_i32_0 = arith.constant 0 : i32
    %c0_i32_1 = arith.constant 0 : i32
    return %c0_i32, %c0_i32_0 : i32, i32
  }
  func.func @transform_3(%arg0: i32) -> (i32, i32) {
    %c0_i32 = arith.constant 0 : i32
    %c0_i32_0 = arith.constant 0 : i32
    return %c0_i32, %arg0 : i32, i32
  }
}

</mosaic_0001>

<llo_original>
// kernel: run.1
$region0: #{run.1}
  #allocation0 [shape = 'u32[]', space=smem, size = 0x4, offset = 0x4, fixed_abs, tag = 'smem constant byte address 0x4 - core index']
  #allocation1 [shape = 'u32[144,128]{1,0:T(1,128)}', space=vmem, size = 0x12000, scoped, tag = 'internal scratch']
  %s0 = inlined_call_operand.vmem [shape: f32[2,128], index: 0, kind: input, shape index: {}]
  %s1 = inlined_call_operand.vmem [shape: f32[20,1], index: 1, kind: input, shape index: {}]
  %s2 = inlined_call_operand.vmem [shape: f32[20,1], index: 2, kind: input, shape index: {}]
  %s3 = inlined_call_operand.vmem [shape: f32[20,128], index: 3, kind: output, shape index: {}]
  %s4 = sld [smem:[#allocation0]]
  $region22: #{run.1} parent=0
    _
  %s6 = ssub.s32 1, %s4
  %s7 = scalar_select 0, %s6, %s4
  // Predicated region
  $region2: #{run.1} parent=0 // pred_check
    _
  $region3: #{run.1} parent=0 // pred_check_branch
    %9 = sbr.rel (0) target = $region5
  $region4: #{run.1} parent=0 // pred_region
    _
  $region5: #{run.1} parent=0 // pred_fallthru
    _
  // Predicated region
  $region6: #{run.1} parent=0 // pred_check
    _
  $region7: #{run.1} parent=0 // pred_check_branch
    %11 = sbr.rel (0) target = $region9
  $region8: #{run.1} parent=0 // pred_region
    _
  $region9: #{run.1} parent=0 // pred_fallthru
    _
  // Predicated region
  $region10: #{run.1} parent=0 // pred_check
    _
  $region11: #{run.1} parent=0 // pred_check_branch
    %13 = sbr.rel (0) target = $region13
  $region12: #{run.1} parent=0 // pred_region
    _
  $region13: #{run.1} parent=0 // pred_fallthru
    _
  %v14 = vld [vmem:[%s0] sm:$0x1]
  %v15 = vld [vmem:[%s0 + $0x1] sm:$0x1]
  %v16 = vld [vmem:[%s1] sm:$0xff]
  %v17 = vld [vmem:[%s1 + $0x8] sm:$0xff]
  %v18 = vld [vmem:[%s1 + $0x10] sm:$0xf]
  %v19 = vld [vmem:[%s2] sm:$0xff]
  %v20 = vld [vmem:[%s2 + $0x8] sm:$0xff]
  %v21 = vld [vmem:[%s2 + $0x10] sm:$0xf]
  %23 = vset.pattern.permute.xlu0 0
  %24 = vperm.xlu0 %23, %v19
  %v25 = vpop.permute.xlu0 %24
  %28 = vset.pattern.permute.xlu0 0
  %29 = vperm.xlu0 %28, %v20
  %v30 = vpop.permute.xlu0 %29
  %33 = vset.pattern.permute.xlu0 0
  %34 = vperm.xlu0 %33, %v21
  %v35 = vpop.permute.xlu0 %34
  %v37 = vlaneseq
  %v38 = vshrl.u32 %v37, 7
  %v39 = vsub.s32 0, %v38
  %v40 = vrot.slane %v14, %v39
  %v41 = vmul.f32 %v25, %v40
  %v42 = vmul.f32 %v30, %v40
  %v43 = vmul.f32 %v35, %v40
  %45 = vset.pattern.permute.xlu0 0
  %46 = vperm.xlu0 %45, %v16
  %v47 = vpop.permute.xlu0 %46
  %50 = vset.pattern.permute.xlu0 0
  %51 = vperm.xlu0 %50, %v17
  %v52 = vpop.permute.xlu0 %51
  %55 = vset.pattern.permute.xlu0 0
  %56 = vperm.xlu0 %55, %v18
  %v57 = vpop.permute.xlu0 %56
  %v59 = vadd.f32 %v47, %v41
  %v60 = vadd.f32 %v52, %v42
  %v61 = vadd.f32 %v57, %v43
  %v62 = vsub.f32 1.0, %v19
  %v63 = vsub.f32 1.0, %v20
  %v64 = vsub.f32 1.0, %v21
  %66 = vset.pattern.permute.xlu0 0
  %67 = vperm.xlu0 %66, %v62
  %v68 = vpop.permute.xlu0 %67
  %71 = vset.pattern.permute.xlu0 0
  %72 = vperm.xlu0 %71, %v63
  %v73 = vpop.permute.xlu0 %72
  %76 = vset.pattern.permute.xlu0 0
  %77 = vperm.xlu0 %76, %v64
  %v78 = vpop.permute.xlu0 %77
  %v80 = vlaneseq
  %v81 = vshrl.u32 %v80, 7
  %v82 = vsub.s32 0, %v81
  %v83 = vrot.slane %v15, %v82
  %v84 = vmul.f32 %v68, %v83
  %v85 = vmul.f32 %v73, %v83
  %v86 = vmul.f32 %v78, %v83
  %v87 = vadd.f32 %v59, %v84
  %v88 = vadd.f32 %v60, %v85
  %v89 = vadd.f32 %v61, %v86
  %90 = vst [vmem:[%s3] sm:$0xff] %v87
  %91 = vst [vmem:[%s3 + $0x8] sm:$0xff] %v88
  %92 = vst [vmem:[%s3 + $0x10] sm:$0xf] %v89
  // Predicated region
  $region14: #{run.1} parent=0 // pred_check
    _
  $region15: #{run.1} parent=0 // pred_check_branch
    %94 = sbr.rel (0) target = $region17
  $region16: #{run.1} parent=0 // pred_region
    _
  $region17: #{run.1} parent=0 // pred_fallthru
    _
  // Predicated region
  $region18: #{run.1} parent=0 // pred_check
    _
  $region19: #{run.1} parent=0 // pred_check_branch
    %96 = sbr.rel (0) target = $region21
  $region20: #{run.1} parent=0 // pred_region
    _
  $region21: #{run.1} parent=0 // pred_fallthru
    _

</llo_original>
